<compile_context>
chip_gen: v7x
topology: tpu7x:2x2x1
jax: 0.10.0
libtpu: 0.0.40
codegen_flags: <defaults>
</compile_context>

<pallas_src>
import math

import jax
import jax.numpy as jnp
from jax.experimental import pallas as pl
from jax.experimental.pallas import tpu as pltpu


_BLOCK_BYTES_TARGET = 2 * 1024 * 1024   # per-block budget (safe on v5e/v6e/v7x)
_MIN_SPLIT_BYTES = 256 * 1024           # never split blocks below this
_MIN_TOTAL_STEPS = 8                    # encourage pipelining / both v7x TCs


def _coalesce(shape, perm):
    """Merge input axes that remain adjacent & in-order across the permutation."""
    groups = []
    for p in perm:
        if groups and p == groups[-1][-1] + 1:
            groups[-1].append(p)
        else:
            groups.append([p])
    in_order = sorted(groups, key=lambda g: g[0])
    new_shape = tuple(math.prod(shape[a] for a in g) for g in in_order)
    gid = {tuple(g): i for i, g in enumerate(in_order)}
    new_perm = tuple(gid[tuple(g)] for g in groups)
    return new_shape, new_perm


def _permute_coalesced(x, perm):
    """Permute a coalesced (no adjacent preserved pairs) array with one kernel."""
    r = x.ndim
    s = x.shape
    inv = [0] * r
    for j, a in enumerate(perm):
        inv[a] = j
    out_shape = tuple(s[a] for a in perm)

    lane_moves = perm[-1] != r - 1
    # Core axes: input lane axis (r-1) plus the axis that becomes the output
    # lane axis (if it moves) or the output sublane axis (if lane preserved).
    c0 = perm[-1] if lane_moves else perm[-2]
    transpose_core = lane_moves

    itemsize = jnp.dtype(x.dtype).itemsize
    sub_q = max(8, 32 // max(1, itemsize))          # dtype sublane packing
    q0 = 128 if inv[c0] == r - 1 else sub_q          # c0 is an output lane axis?
    q1 = 128                                         # input lane axis

    core_out_pos = (inv[c0], inv[r - 1])
    lead_out = [j for j in range(r) if j not in core_out_pos]
    gpos = {j: t for t, j in enumerate(lead_out)}
    lead_steps = 1
    for j in lead_out:
        lead_steps *= out_shape[j]

    # Per-block byte budget; force extra core splits when the lead grid is
    # tiny so small/degenerate grids still pipeline and shard across TCs.
    target = _BLOCK_BYTES_TARGET
    if lead_steps < _MIN_TOTAL_STEPS:
        core_bytes = s[c0] * s[r - 1] * itemsize
        want = -(-_MIN_TOTAL_STEPS // lead_steps)
        target = min(target, max(_MIN_SPLIT_BYTES, -(-core_bytes // want)))

    def _shrink(t, q):
        return max(q, (max(q, t // 2) // q) * q)

    t0, t1 = s[c0], s[r - 1]
    while t0 * t1 * itemsize > target:
        if t1 > q1 and (t1 >= t0 or t0 <= q0):
            t1 = _shrink(t1, q1)
        elif t0 > q0:
            t0 = _shrink(t0, q0)
        else:
            break

    n0 = pl.cdiv(s[c0], t0)
    n1 = pl.cdiv(s[r - 1], t1)
    grid = tuple(out_shape[j] for j in lead_out) + (n0, n1)

    def in_index_map(*g):
        return tuple(
            g[-2] if a == c0 else (g[-1] if a == r - 1 else g[gpos[inv[a]]])
            for a in range(r))

    def out_index_map(*g):
        return tuple(
            g[-2] if perm[j] == c0 else (g[-1] if perm[j] == r - 1 else g[gpos[j]])
            for j in range(r))

    in_block = tuple(t0 if a == c0 else (t1 if a == r - 1 else 1)
                     for a in range(r))
    out_block = tuple(t0 if perm[j] == c0 else (t1 if perm[j] == r - 1 else 1)
                      for j in range(r))

    in_sel = tuple(slice(None) if a in (c0, r - 1) else 0 for a in range(r))
    out_sel = tuple(slice(None) if perm[j] in (c0, r - 1) else 0
                    for j in range(r))

    def kernel(x_ref, o_ref):
        core = x_ref[in_sel]                        # dense (t0, t1) tile
        if transpose_core:
            core = jnp.swapaxes(core, -1, -2)       # single 2-D transpose (XLU)
        o_ref[out_sel] = core

    nbytes = x.size * itemsize
    return pl.pallas_call(
        kernel,
        out_shape=jax.ShapeDtypeStruct(out_shape, x.dtype),
        grid_spec=pltpu.PrefetchScalarGridSpec(
            num_scalar_prefetch=0,
            grid=grid,
            in_specs=[pl.BlockSpec(in_block, in_index_map)],
            out_specs=pl.BlockSpec(out_block, out_index_map),
        ),
        compiler_params=pltpu.CompilerParams(
            dimension_semantics=("parallel",) * len(grid)),
        cost_estimate=pl.CostEstimate(
            flops=0, transcendentals=0, bytes_accessed=2 * nbytes),
    )(x)


def pallas_permute(x, dims):
    """Equivalent of torch.Tensor.permute(dims) as a Pallas TPU kernel."""
    ndim = x.ndim
    perm = tuple(int(d) % ndim for d in dims) if ndim else ()
    assert len(perm) == ndim and sorted(perm) == list(range(ndim)), (
        f"invalid permutation {dims} for rank-{ndim} input")

    # Pure view: identity permutation -> no data movement, no kernel.
    if ndim <= 1 or perm == tuple(range(ndim)):
        return x

    out_shape_true = tuple(x.shape[a] for a in perm)
    if x.size == 0:
        return jnp.transpose(x, perm)               # degenerate, nothing to move

    # Coalesce preserved adjacent runs (free reshapes on contiguous data).
    s_c, perm_c = _coalesce(x.shape, perm)
    if perm_c == tuple(range(len(s_c))):            # defensive; implies identity
        return x

    x_c = jnp.reshape(x, s_c)
    out_c = _permute_coalesced(x_c, perm_c)
    return jnp.reshape(out_c, out_shape_true)


class Permute:
    """JAX/Pallas analogue of the PyTorch Permute module."""

    def __init__(self, *args):
        if len(args) == 1 and isinstance(args[0], (tuple, list)):
            args = tuple(args[0])
        self.args = tuple(args)

    def __call__(self, x):
        return pallas_permute(x, self.args)


if __name__ == "__main__":
    key = jax.random.PRNGKey(0)
    ks = jax.random.split(key, 6)

    def check(x, dims):
        y = jax.block_until_ready(Permute(*dims)(x))
        ref = jnp.transpose(x, tuple(d % x.ndim for d in dims))
        assert y.shape == ref.shape and y.dtype == ref.dtype
        assert bool(jnp.array_equal(y, ref)), f"mismatch: dims={dims} shape={x.shape}"

    # Canonical promptTTS usage: (B, C, T) <-> (B, T, C) around Conv1d.
    x3 = jax.random.normal(ks[0], (2, 16, 128), dtype=jnp.float32)
    check(x3, (0, 2, 1))
    x3b = jax.random.normal(ks[1], (2, 128, 16), dtype=jnp.float32)
    check(x3b, (0, 2, 1))

    # Plain 2-D transpose.
    x2 = jax.random.normal(ks[2], (16, 128), dtype=jnp.float32)
    check(x2, (1, 0))

    # Leading-axis shuffle, lane preserved (coalesces to rank-3 (1,0,2)).
    x4 = jax.random.normal(ks[3], (2, 4, 16, 16), dtype=jnp.float32)
    check(x4, (1, 0, 2, 3))

    # Lane-preserved shuffle with an axis sitting between the core axes
    # (one of the permutations flagged in the review).
    x4b = jax.random.normal(ks[4], (2, 3, 4, 128), dtype=jnp.float32)
    check(x4b, (0, 2, 1, 3))

    # Permutation that coalesces to a pure 2-D transpose.
    x3c = jax.random.normal(ks[5], (8, 4, 128), dtype=jnp.float32)
    check(x3c, (2, 0, 1))

    # Identity permutation: metadata only, no kernel launch.
    yid = jax.block_until_ready(Permute(0, 1, 2, 3)(x4))
    assert bool(jnp.array_equal(yid, x4))

    print("KERNEL_OK")
</pallas_src>

<mosaic_0001>
module attributes {stable_mosaic.version = 11 : i64} {
  func.func @kernel(%arg0: i32, %arg1: i32, %arg2: i32, %arg3: memref<1x16x128xf32, #tpu.memory_space<vmem>>, %arg4: memref<1x128x16xf32, #tpu.memory_space<vmem>>) attributes {dimension_semantics = [#tpu.dimension_semantics<parallel>, #tpu.dimension_semantics<parallel>, #tpu.dimension_semantics<parallel>], iteration_bounds = array<i64: 2, 1, 1>, scalar_prefetch = 0 : i64, scratch_operands = 0 : i64, tpu.core_type = #tpu.core_type<tc>, window_params = [{transform_indices = @transform_0, window_bounds = array<i64: 1, 16, 128>}, {transform_indices = @transform_1, window_bounds = array<i64: 1, 128, 16>}]} {
    %c0 = arith.constant 0 : index
    %c0_0 = arith.constant 0 : index
    %c0_1 = arith.constant 0 : index
    %0 = vector.load %arg3[%c0, %c0_0, %c0_1] : memref<1x16x128xf32, #tpu.memory_space<vmem>>, vector<1x16x128xf32>
    %1 = vector.shape_cast %0 : vector<1x16x128xf32> to vector<16x128xf32>
    %2 = tpu.transpose %1, [1, 0] : vector<16x128xf32> -> vector<128x16xf32>
    %c0_2 = arith.constant 0 : index
    %c0_3 = arith.constant 0 : index
    %c0_4 = arith.constant 0 : index
    %3 = vector.load %arg4[%c0_2, %c0_3, %c0_4] : memref<1x128x16xf32, #tpu.memory_space<vmem>>, vector<1x128x16xf32>
    %4 = vector.shape_cast %3 : vector<1x128x16xf32> to vector<128x16xf32>
    %5 = vector.shape_cast %2 : vector<128x16xf32> to vector<1x128x16xf32>
    tpu.vector_store %arg4[%c0_2, %c0_3, %c0_4], %5 {strides = array<i32>} : memref<1x128x16xf32, #tpu.memory_space<vmem>>, vector<1x128x16xf32>,
    return
  }
  func.func @transform_0(%arg0: i32, %arg1: i32, %arg2: i32) -> (i32, i32, i32) {
    %c0_i32 = arith.constant 0 : i32
    return %arg0, %arg1, %arg2 : i32, i32, i32
  }
  func.func @transform_1(%arg0: i32, %arg1: i32, %arg2: i32) -> (i32, i32, i32) {
    %c0_i32 = arith.constant 0 : i32
    return %arg0, %arg2, %arg1 : i32, i32, i32
  }
}

</mosaic_0001>

<llo_original>
// kernel: tpu_custom_call.1
$region0: #{tpu_custom_call.1}
  #allocation0 [shape = 'u32[]', space=smem, size = 0x4, offset = 0x4, fixed_abs, tag = 'smem constant byte address 0x4 - core index']
  #allocation1 [shape = 'u32[144,128]{1,0:T(1,128)}', space=vmem, size = 0x12000, scoped, tag = 'internal scratch']
  %s0 = inlined_call_operand.hbm [shape: f32[2,16,128], index: 0, kind: input, shape index: {}]
  %s1 = inlined_call_operand.vmem [shape: f32[2,128,16], index: 1, kind: output, shape index: {}]
  %s2 = sld [smem:[#allocation0]]
  $region41: #{tpu_custom_call.1} parent=0
    _
  %s4 = ssub.s32 1, %s2
  %s5 = scalar_select 0, %s4, %s2
  $region1: #{tpu_custom_call.1} parent=0
    #allocation2 [shape = 'u8[16384]{0}', space=vmem, size = 0x4000, scoped, tag = 'input window, operand 0']
    #allocation3 [shape = 's32[2]{0}', space=sflag, size = 0x8, scoped, tag = 'scoped memory for tpu_custom_call.1']
    %6 = vsyncpa [#allocation3], 0
    %s7 = scalar_lea.sflag [#allocation3], 1
    %8 = vsyncpa %s7, 0
    loop: start=0, step=1, limit=4
    $region2: #{tpu_custom_call.1} parent=1 // loop_pre_header
      _
    $region3: #{tpu_custom_call.1} parent=1 // loop_header
      %s10 = sphi 0, %s14
      %p11 = scmp.ge.s32.totalorder %s10, 4
      %s17 = sphi 0, %s36
      %s18 = sphi 0, %s32
      %s19 = sphi 0, %s28
      %s20 = sphi 0, %s17
      %s21 = sphi 0, %s18
      %s22 = sphi 0, %s19
      %s23 = sphi 0, %s20
      %s24 = sphi 0, %s21
      %s25 = sphi 0, %s22
      %s43 = sphi 0, %s45
      %s46 = sphi 0, %s43
      %s47 = sphi 0, %s46
      %s63 = sphi 0, %s47
      %s73 = sphi 0, %s75
      %s76 = sphi 0, %s73
      %s77 = sphi 0, %s76
      %s93 = sphi 0, %s77
    $region4: #{tpu_custom_call.1} parent=1 // loop_header_branch
      %13 = sbr.rel (%p11) target = $region8
    $region5: #{tpu_custom_call.1} parent=1 // loop_body
      %s15 = ssub.s32 %s10, 1
      %s16 = ssub.s32 %s10, 2
      %s26 = sadd.s32 1, %s19
      %p27 = scmp.ge.s32.totalorder %s26, 1
      %s28 = scalar_select %p27, 0, %s26
      %s29 = sadd.s32 1, %s18
      %s30 = scalar_select %p27, %s29, %s18
      %p31 = scmp.ge.s32.totalorder %s30, 1
      %s32 = scalar_select %p31, 0, %s30
      %s33 = sadd.s32 1, %s17
      %s34 = scalar_select %p31, %s33, %s17
      %p35 = scmp.ge.s32.totalorder %s34, 2
      %s36 = scalar_select %p35, 0, %s34
      %s37 = ssub.s32 %s17, %s36
      %s38 = ssub.s32 %s18, %s32
      %s39 = sor.u32 %s37, %s38
      %s40 = ssub.s32 %s19, %s28
      %s41 = sor.u32 %s39, %s40
      %p42 = scmp.eq.s32.totalorder %s41, 0
      %s44 = sadd.s32 %s43, 1
      %s45 = scalar_select %p42, %s43, %s44
      %p48 = pneg %p42
      %p49 = scmp.eq.s32.totalorder %s10, 1
      %p50 = por %p48, %p49
      %p51 = scmp.ne.s32.totalorder %s43, %s46
      %p52 = scmp.eq.s32.totalorder %s10, 0
      %p53 = por %p51, %p52
      %p54 = scmp.ne.s32.totalorder %s43, %s46
      %p55 = scmp.eq.s32.totalorder %s15, 1
      %p56 = por %p54, %p55
      %p57 = scmp.ne.s32.totalorder %s46, %s47
      %p58 = scmp.eq.s32.totalorder %s15, 0
      %p59 = por %p57, %p58
      %p60 = scmp.ne.s32.totalorder %s46, %s47
      %p61 = scmp.eq.s32.totalorder %s16, 1
      %p62 = por %p60, %p61
      %p64 = scmp.ne.s32.totalorder %s47, %s63
      %p65 = scmp.eq.s32.totalorder %s16, 0
      %p66 = por %p64, %p65
      %s67 = ssub.s32 %s17, %s36
      %s68 = ssub.s32 %s19, %s28
      %s69 = sor.u32 %s67, %s68
      %s70 = ssub.s32 %s18, %s32
      %s71 = sor.u32 %s69, %s70
      %p72 = scmp.eq.s32.totalorder %s71, 0
      %s74 = sadd.s32 %s73, 1
      %s75 = scalar_select %p72, %s73, %s74
      %p78 = pneg %p72
      %p79 = scmp.eq.s32.totalorder %s10, 1
      %p80 = por %p78, %p79
      %p81 = scmp.ne.s32.totalorder %s73, %s76
      %p82 = scmp.eq.s32.totalorder %s10, 0
      %p83 = por %p81, %p82
      %p84 = scmp.ne.s32.totalorder %s73, %s76
      %p85 = scmp.eq.s32.totalorder %s15, 1
      %p86 = por %p84, %p85
      %p87 = scmp.ne.s32.totalorder %s76, %s77
      %p88 = scmp.eq.s32.totalorder %s15, 0
      %p89 = por %p87, %p88
      %p90 = scmp.ne.s32.totalorder %s76, %s77
      %p91 = scmp.eq.s32.totalorder %s16, 1
      %p92 = por %p90, %p91
      %p94 = scmp.ne.s32.totalorder %s77, %s93
      %p95 = scmp.eq.s32.totalorder %s16, 0
      %p96 = por %p94, %p95
      %p97 = scmp.le.s32.totalorder 1, %s10
      %p98 = scmp.lt.s32.totalorder %s10, 3
      %p99 = pnand %p97, %p98
      %p100 = pneg %p99
      // Predicated region
      $region9: #{tpu_custom_call.1} parent=5 // pred_check
        _
      $region10: #{tpu_custom_call.1} parent=5 // pred_check_branch
        %102 = sbr.rel (%p99) target = $region12
      $region11: #{tpu_custom_call.1} parent=5 // pred_region
        %s103 = ssub.s32 %s10, 1
      $region12: #{tpu_custom_call.1} parent=5 // pred_fallthru
        _
      %p104 = scmp.lt.s32.totalorder %s10, 2
      // Predicated region
      $region13: #{tpu_custom_call.1} parent=5 // pred_check
        %p105 = pneg %p104
      $region14: #{tpu_custom_call.1} parent=5 // pred_check_branch
        %107 = sbr.rel (%p105) target = $region16
      $region15: #{tpu_custom_call.1} parent=5 // pred_region
        // Predicated region
        $region17: #{tpu_custom_call.1} parent=15 // pred_check
          %p108 = pneg %p53
        $region18: #{tpu_custom_call.1} parent=15 // pred_check_branch
          %110 = sbr.rel (%p108) target = $region20
        $region19: #{tpu_custom_call.1} parent=15 // pred_region
          %s111 = sand.u32 %s43, 1
          %s112 = scalar_lea.sflag [#allocation3], %s111
          %s113 = sand.u32 %s43, 1
          %s114 = smul.addr %s113, 16
          %s115 = scalar_lea.vmem [#allocation2], %s114
          %s116 = smul.u32 2, %s18
          %s118 = ssub.s32 256, 256
          %119 = vsyncadd %s112, %s118
          %s120 = sadd.s32 %s19, %s116
          %s121 = smul.addr %s17, 2
          %s122 = sadd.s32 %s120, %s121
          %s123 = smul.addr %s122, 128
          %s124 = scalar_lea.hbm %s0, %s123
          %s125 = sshll.u32 %s115, 4
          %s126 = int_to_ptr.vmem [resolvable:$true] %s125
          %131 = dma.hbm_to_vmem [thread:$0]  %s124, 256, %s126, %s112, 128, 128, 8
        $region20: #{tpu_custom_call.1} parent=15 // pred_fallthru
          _
      $region16: #{tpu_custom_call.1} parent=5 // pred_fallthru
        _
      %p132 = scmp.le.s32.totalorder 1, %s10
      %p133 = scmp.lt.s32.totalorder %s10, 3
      %p134 = pnand %p132, %p133
      %p135 = pneg %p134
      // Predicated region
      $region21: #{tpu_custom_call.1} parent=5 // pred_check
        _
      $region22: #{tpu_custom_call.1} parent=5 // pred_check_branch
        %137 = sbr.rel (%p134) target = $region24
      $region23: #{tpu_custom_call.1} parent=5 // pred_region
        %s138 = ssub.s32 %s10, 1
        %s139 = sand.u32 %s46, 1
        %s140 = scalar_lea.sflag [#allocation3], %s139
        %s141 = sand.u32 %s46, 1
        %s142 = smul.addr %s141, 16
        %s143 = scalar_lea.vmem [#allocation2], %s142
        // Predicated region
        $region25: #{tpu_custom_call.1} parent=23 // pred_check
          %p144 = pneg %p59
        $region26: #{tpu_custom_call.1} parent=23 // pred_check_branch
          %146 = sbr.rel (%p144) target = $region28
        $region27: #{tpu_custom_call.1} parent=23 // pred_region
          %147 = dma.done %s140, 256
        $region28: #{tpu_custom_call.1} parent=23 // pred_fallthru
          _
        %s148 = sand.u32 %s46, 1
        %s149 = scalar_lea.sflag [#allocation3], %s148
        %s150 = sand.u32 %s46, 1
        %s151 = smul.addr %s150, 16
        %s152 = scalar_lea.vmem [#allocation2], %s151
        %p153 = pneg %p59
        %p154 = pneg %p56
        %p155 = pneg %p89
        %p156 = pneg %p86
        %s157 = smul.u32 16, %s22
        %p158 = scmp.lt.s32.totalorder %s20, 1
        %s159 = scalar_select %p158, %s20, 1
        %p160 = scmp.lt.s32.totalorder %s157, 15
        %s161 = scalar_select %p160, %s157, 15
        %p162 = scmp.lt.s32.totalorder %s21, 0
        %s163 = scalar_select %p162, %s21, 0
        %s164 = sadd.s32 %s163, %s161
        %s165 = smul.addr %s159, 16
        %s166 = sadd.s32 %s164, %s165
        %s167 = smul.addr %s166, 8
        %s168 = scalar_lea.vmem %s1, %s167
        %s169 = smul.u32 2, %s21
        %s170 = smul.u32 16, %s22
        %p171 = scmp.lt.s32.totalorder %s20, 1
        %s172 = scalar_select %p171, %s20, 1
        %p173 = scmp.lt.s32.totalorder %s170, 15
        %s174 = scalar_select %p173, %s170, 15
        %p175 = scmp.lt.s32.totalorder %s21, 0
        %s176 = scalar_select %p175, %s21, 0
        %s177 = sadd.s32 %s176, %s174
        %s178 = smul.addr %s172, 16
        %s179 = sadd.s32 %s177, %s178
        %s180 = smul.addr %s179, 8
        %s181 = scalar_lea.vmem %s1, %s180
        %s182 = smul.u32 16, %s22
        %v183 = vld [vmem:[%s143] sm:$0xff]
        %v184 = vld [vmem:[%s143 + $0x8] sm:$0xff]
        %185 = vxpose.xlu0.b32.start [1/16] %v183, 128
        %186 = vxpose.xlu0.b32.cont [2/16] %v184, 128
        %187 = vxpose.xlu0.b32.cont [3/16] 0.0, 128
        %188 = vxpose.xlu0.b32.cont [4/16] 0.0, 128
        %189 = vxpose.xlu0.b32.cont [5/16] 0.0, 128
        %190 = vxpose.xlu0.b32.cont [6/16] 0.0, 128
        %191 = vxpose.xlu0.b32.cont [7/16] 0.0, 128
        %192 = vxpose.xlu0.b32.cont [8/16] 0.0, 128
        %193 = vxpose.xlu0.b32.cont [9/16] 0.0, 128
        %194 = vxpose.xlu0.b32.cont [10/16] 0.0, 128
        %195 = vxpose.xlu0.b32.cont [11/16] 0.0, 128
        %196 = vxpose.xlu0.b32.cont [12/16] 0.0, 128
        %197 = vxpose.xlu0.b32.cont [13/16] 0.0, 128
        %198 = vxpose.xlu0.b32.cont [14/16] 0.0, 128
        %199 = vxpose.xlu0.b32.cont [15/16] 0.0, 128
        %200 = vxpose.xlu0.b32.end [16/16] 0.0, 128
        %v201 = vpop.trf.xlu0
        %v202 = vpop.trf.xlu0
        %v203 = vpop.trf.xlu0
        %v204 = vpop.trf.xlu0
        %v205 = vpop.trf.xlu0
        %v206 = vpop.trf.xlu0
        %v207 = vpop.trf.xlu0
        %v208 = vpop.trf.xlu0
        %v209 = vpop.trf.xlu0
        %v210 = vpop.trf.xlu0
        %v211 = vpop.trf.xlu0
        %v212 = vpop.trf.xlu0
        %v213 = vpop.trf.xlu0
        %v214 = vpop.trf.xlu0
        %v215 = vpop.trf.xlu0
        %v216 = vpop.trf.xlu0
        %vm217 = vcmask 130048
        %218 = vst.msk [vmem:[%s181] sm:$0xff] %vm217, %v201
        %219 = vst.msk [vmem:[%s181 + $0x8] sm:$0xff] %vm217, %v202
        %220 = vst.msk [vmem:[%s181 + $0x10] sm:$0xff] %vm217, %v203
        %221 = vst.msk [vmem:[%s181 + $0x18] sm:$0xff] %vm217, %v204
        %222 = vst.msk [vmem:[%s181 + $0x20] sm:$0xff] %vm217, %v205
        %223 = vst.msk [vmem:[%s181 + $0x28] sm:$0xff] %vm217, %v206
        %224 = vst.msk [vmem:[%s181 + $0x30] sm:$0xff] %vm217, %v207
        %225 = vst.msk [vmem:[%s181 + $0x38] sm:$0xff] %vm217, %v208
        %226 = vst.msk [vmem:[%s181 + $0x40] sm:$0xff] %vm217, %v209
        %227 = vst.msk [vmem:[%s181 + $0x48] sm:$0xff] %vm217, %v210
        %228 = vst.msk [vmem:[%s181 + $0x50] sm:$0xff] %vm217, %v211
        %229 = vst.msk [vmem:[%s181 + $0x58] sm:$0xff] %vm217, %v212
        %230 = vst.msk [vmem:[%s181 + $0x60] sm:$0xff] %vm217, %v213
        %231 = vst.msk [vmem:[%s181 + $0x68] sm:$0xff] %vm217, %v214
        %232 = vst.msk [vmem:[%s181 + $0x70] sm:$0xff] %vm217, %v215
        %233 = vst.msk [vmem:[%s181 + $0x78] sm:$0xff] %vm217, %v216
        %s234 = smul.u32 16, %s22
        %p235 = scmp.lt.s32.totalorder %s20, 1
        %s236 = scalar_select %p235, %s20, 1
        %p237 = scmp.lt.s32.totalorder %s234, 15
        %s238 = scalar_select %p237, %s234, 15
        %p239 = scmp.lt.s32.totalorder %s21, 0
        %s240 = scalar_select %p239, %s21, 0
        %s241 = sadd.s32 %s240, %s238
        %s242 = smul.addr %s236, 16
        %s243 = sadd.s32 %s241, %s242
        %s244 = smul.addr %s243, 8
        %s245 = scalar_lea.vmem %s1, %s244
        // Predicated region
        $region29: #{tpu_custom_call.1} parent=23 // pred_check
          %p246 = pneg %p86
        $region30: #{tpu_custom_call.1} parent=23 // pred_check_branch
          %248 = sbr.rel (%p246) target = $region32
        $region31: #{tpu_custom_call.1} parent=23 // pred_region
          %s249 = smul.u32 16, %s22
        $region32: #{tpu_custom_call.1} parent=23 // pred_fallthru
          _
      $region24: #{tpu_custom_call.1} parent=5 // pred_fallthru
        _
      %p250 = scmp.le.s32.totalorder 2, %s10
      // Predicated region
      $region33: #{tpu_custom_call.1} parent=5 // pred_check
        %p251 = pneg %p250
      $region34: #{tpu_custom_call.1} parent=5 // pred_check_branch
        %253 = sbr.rel (%p251) target = $region36
      $region35: #{tpu_custom_call.1} parent=5 // pred_region
        %s254 = ssub.s32 %s10, 2
        // Predicated region
        $region37: #{tpu_custom_call.1} parent=35 // pred_check
          %p255 = pneg %p92
        $region38: #{tpu_custom_call.1} parent=35 // pred_check_branch
          %257 = sbr.rel (%p255) target = $region40
        $region39: #{tpu_custom_call.1} parent=35 // pred_region
          %s258 = smul.u32 16, %s25
          %p259 = scmp.lt.s32.totalorder %s23, 1
          %s260 = scalar_select %p259, %s23, 1
          %p261 = scmp.lt.s32.totalorder %s258, 15
          %s262 = scalar_select %p261, %s258, 15
          %p263 = scmp.lt.s32.totalorder %s24, 0
          %s264 = scalar_select %p263, %s24, 0
          %s265 = sadd.s32 %s264, %s262
          %s266 = smul.addr %s260, 16
          %s267 = sadd.s32 %s265, %s266
          %s268 = smul.addr %s267, 8
          %s269 = scalar_lea.vmem %s1, %s268
        $region40: #{tpu_custom_call.1} parent=35 // pred_fallthru
          _
      $region36: #{tpu_custom_call.1} parent=5 // pred_fallthru
        _
    $region6: #{tpu_custom_call.1} parent=1 // loop_footer
      %s14 = sadd.s32 1, %s10
    $region7: #{tpu_custom_call.1} parent=1 // loop_footer_branch
      %9 = sbr.rel target = $region3
    $region8: #{tpu_custom_call.1} parent=1 // loop_exit
      _
    %270 = vsyncpa [#allocation3], 1
    %s271 = scalar_lea.sflag [#allocation3], 1
    %272 = vsyncpa %s271, 1

</llo_original>
